<compile_context>
chip_gen: v7x
topology: tpu7x:2x2x1
jax: 0.10.0
libtpu: 0.0.40
codegen_flags: <defaults>
</compile_context>

<pallas_src>
import jax
import jax.numpy as jnp
from jax.experimental import pallas as pl
from jax.experimental.pallas import tpu as pltpu


def _round_up(x, m):
    return ((x + m - 1) // m) * m


def _leaky_relu(x, slope=0.2):
    return jnp.where(x >= 0, x, slope * x)


def discriminator_kernel(
    x_ref,                      # (TB, 784) f32  -- raw input tile
    w1_ref, b1_ref,             # (784, 4H) bf16, (1, 4H) f32
    w2_ref, b2_ref,             # (4H, 2H)  bf16, (1, 2H) f32
    w3_ref, b3_ref,             # (2H, H)   bf16, (1, H)  f32
    x3_ref,                     # (TB, H)   f32
):
    # bf16 cast done in-kernel (free on the VPU under the input DMA shadow);
    # avoids a wrapper-side pad/astype pass over the dominant HBM stream.
    x = x_ref[...].astype(w1_ref.dtype)

    h1 = jnp.dot(x, w1_ref[...], preferred_element_type=jnp.float32) + b1_ref[...]
    h1 = _leaky_relu(h1)                               # fc1 + leaky_relu (dropout = id)

    h2 = jnp.dot(h1.astype(w2_ref.dtype), w2_ref[...],
                 preferred_element_type=jnp.float32) + b2_ref[...]
    h2 = _leaky_relu(h2)                               # fc2 + leaky_relu (dropout = id)

    h3 = jnp.dot(h2.astype(w3_ref.dtype), w3_ref[...],
                 preferred_element_type=jnp.float32) + b3_ref[...]
    h3 = _leaky_relu(h3)                               # fc3 + leaky_relu (dropout = id)

    x3_ref[...] = h3.astype(x3_ref.dtype)              # forward() returns this
    # fc4 is intentionally NOT computed: its result is discarded by forward().


def prepare_params(params, compute_dtype=jnp.bfloat16):
    """One-time cast of fc1..fc3 params (hoisted out of the per-step forward)."""
    (w1, b1), (w2, b2), (w3, b3) = params[:3]
    return (
        (w1.astype(compute_dtype), b1.astype(jnp.float32)),
        (w2.astype(compute_dtype), b2.astype(jnp.float32)),
        (w3.astype(compute_dtype), b3.astype(jnp.float32)),
    )


def _choose_tile_b(B, block_b):
    """Batch tile: large enough to amortize per-step overhead, >=2 tiles for
    the v7x megacore when the batch is big, and <=~10% padding waste."""
    if B <= block_b:
        if B >= 1024:
            return _round_up(pl.cdiv(B, 2), 8)   # keep both TensorCores busy (v7x)
        return B                                  # one tile == full dim: no pad, no constraint
    tb = block_b
    while tb > 256 and _round_up(B, tb) * 10 > 11 * B:
        tb //= 2                                  # avoid >10% batch-padding waste
    return tb


def discriminator_forward(x_img, prepared_params, *, block_b=2048):
    """x_img: (B, 1, 28, 28) float32 (NCHW). prepared_params: prepare_params(...).
    Returns (B, hidden_dim) float32 (post-fc3 activations, as in the PyTorch forward)."""
    B = x_img.shape[0]
    x = x_img.reshape(B, 28 * 28)                 # x.view(-1, 28*28); no cast/pad here

    (w1, b1), (w2, b2), (w3, b3) = prepared_params
    in_features = w1.shape[0]                     # 784
    hidden_dim = w3.shape[1]

    TB = _choose_tile_b(B, block_b)
    B_pad = _round_up(B, TB)
    if B_pad != B:
        # Pallas TPU gives no guarantee on OOB block contents -> pad the tail
        # tile explicitly (common power-of-2 GAN batches skip this entirely).
        x = jnp.pad(x, ((0, B_pad - B), (0, 0)))

    grid = (B_pad // TB,)

    def const_spec(shape):
        # Whole-array block; block index never changes -> DMA'd once, VMEM-resident.
        return pl.BlockSpec(shape, lambda i: (0,) * len(shape))

    flops = 2 * B_pad * (in_features * w1.shape[1]
                         + w2.shape[0] * w2.shape[1]
                         + w3.shape[0] * w3.shape[1])
    bytes_accessed = (x.size * x.dtype.itemsize
                      + sum(a.size * a.dtype.itemsize
                            for a in (w1, b1, w2, b2, w3, b3))
                      + B_pad * hidden_dim * 4)

    x3 = pl.pallas_call(
        discriminator_kernel,
        out_shape=jax.ShapeDtypeStruct((B_pad, hidden_dim), jnp.float32),
        grid=grid,
        in_specs=[
            pl.BlockSpec((TB, in_features), lambda i: (i, 0)),   # batch-tiled raw input
            const_spec(w1.shape), const_spec(b1.shape),
            const_spec(w2.shape), const_spec(b2.shape),
            const_spec(w3.shape), const_spec(b3.shape),
        ],
        out_specs=pl.BlockSpec((TB, hidden_dim), lambda i: (i, 0)),
        compiler_params=pltpu.CompilerParams(
            dimension_semantics=("parallel",),
            vmem_limit_bytes=32 * 1024 * 1024,     # explicit: f32 input tile x2 bufs
        ),                                         # + weights/intermediates ~20 MB @ TB=2048
        cost_estimate=pl.CostEstimate(
            flops=flops, transcendentals=0, bytes_accessed=bytes_accessed),
    )(x, w1, b1, w2, b2, w3, b3)

    return x3[:B]


def init_params(key, input_size=784, hidden_dim=32, output_size=1):
    """Deterministic parameter init.  Weights stored as (in, out)."""
    dims = [
        (input_size, hidden_dim * 4),      # fc1
        (hidden_dim * 4, hidden_dim * 2),  # fc2
        (hidden_dim * 2, hidden_dim),      # fc3
        (hidden_dim, output_size),         # fc4 (kept for API parity; unused)
    ]
    params = []
    for (fan_in, fan_out) in dims:
        key, kw, kb = jax.random.split(key, 3)
        bound = 1.0 / jnp.sqrt(fan_in)
        w = jax.random.uniform(kw, (fan_in, fan_out), jnp.float32, -bound, bound)
        b = jax.random.uniform(kb, (1, fan_out), jnp.float32, -bound, bound)
        params.append((w, b))
    return params


if __name__ == "__main__":
    key = jax.random.PRNGKey(0)
    k_x, k_p = jax.random.split(key)

    B = 2
    x_img = jax.random.normal(k_x, (B, 1, 28, 28), jnp.float32)  # NCHW input
    params = init_params(k_p, input_size=28 * 28, hidden_dim=32, output_size=1)
    prepared = prepare_params(params)   # one-time weight/bias cast (hoisted out of forward)

    y = discriminator_forward(x_img, prepared)
    jax.block_until_ready(y)

    # Pure-JAX reference (eval-mode dropout = identity), mirroring the bf16
    # streaming / f32 MXU accumulation numerics of the kernel.
    def ref(x_img, params, cd=jnp.bfloat16):
        x = x_img.reshape(x_img.shape[0], -1)
        (w1, b1), (w2, b2), (w3, b3) = params[:3]
        lrelu = lambda v: jnp.where(v >= 0, v, 0.2 * v)
        h = lrelu(jnp.dot(x.astype(cd), w1.astype(cd),
                          preferred_element_type=jnp.float32) + b1)
        h = lrelu(jnp.dot(h.astype(cd), w2.astype(cd),
                          preferred_element_type=jnp.float32) + b2)
        h = lrelu(jnp.dot(h.astype(cd), w3.astype(cd),
                          preferred_element_type=jnp.float32) + b3)
        return h  # forward() returns post-fc3 activations; fc4 discarded

    y_ref = ref(x_img, params)
    assert y.shape == (B, 32), y.shape
    assert jnp.allclose(y, y_ref, atol=1e-3, rtol=1e-3), float(jnp.max(jnp.abs(y - y_ref)))

    print("KERNEL_OK")
</pallas_src>

<mosaic_0001>
module attributes {stable_mosaic.version = 11 : i64} {
  func.func @discriminator_kernel(%arg0: i32, %arg1: memref<2x784xf32, #tpu.memory_space<vmem>>, %arg2: memref<784x128xbf16, #tpu.memory_space<vmem>>, %arg3: memref<1x128xf32, #tpu.memory_space<vmem>>, %arg4: memref<128x64xbf16, #tpu.memory_space<vmem>>, %arg5: memref<1x64xf32, #tpu.memory_space<vmem>>, %arg6: memref<64x32xbf16, #tpu.memory_space<vmem>>, %arg7: memref<1x32xf32, #tpu.memory_space<vmem>>, %arg8: memref<2x32xf32, #tpu.memory_space<vmem>>) attributes {dimension_semantics = [#tpu.dimension_semantics<parallel>], iteration_bounds = array<i64: 1>, scalar_prefetch = 0 : i64, scratch_operands = 0 : i64, tpu.core_type = #tpu.core_type<tc>, window_params = [{transform_indices = @transform_0, window_bounds = array<i64: 2, 784>}, {pipeline_mode = #tpu.pipeline_mode<synchronous>, transform_indices = @transform_1, window_bounds = array<i64: 784, 128>}, {pipeline_mode = #tpu.pipeline_mode<synchronous>, transform_indices = @transform_2, window_bounds = array<i64: 1, 128>}, {pipeline_mode = #tpu.pipeline_mode<synchronous>, transform_indices = @transform_3, window_bounds = array<i64: 128, 64>}, {pipeline_mode = #tpu.pipeline_mode<synchronous>, transform_indices = @transform_4, window_bounds = array<i64: 1, 64>}, {pipeline_mode = #tpu.pipeline_mode<synchronous>, transform_indices = @transform_5, window_bounds = array<i64: 64, 32>}, {pipeline_mode = #tpu.pipeline_mode<synchronous>, transform_indices = @transform_6, window_bounds = array<i64: 1, 32>}, {transform_indices = @transform_7, window_bounds = array<i64: 2, 32>}]} {
    %c0 = arith.constant 0 : index
    %c0_0 = arith.constant 0 : index
    %0 = vector.load %arg1[%c0, %c0_0] : memref<2x784xf32, #tpu.memory_space<vmem>>, vector<2x784xf32>
    %1 = arith.truncf %0 : vector<2x784xf32> to vector<2x784xbf16>
    %c0_1 = arith.constant 0 : index
    %c0_2 = arith.constant 0 : index
    %2 = vector.load %arg2[%c0_1, %c0_2] : memref<784x128xbf16, #tpu.memory_space<vmem>>, vector<784x128xbf16>
    %cst = arith.constant dense<0.000000e+00> : vector<2x128xf32>
    %3 = tpu.matmul %1, %2, %cst {dimension_numbers = #tpu.dot_dimension_numbers<[1], [0], [0], [1], [0, 0, 1, 1], [], []>} : vector<2x784xbf16>, vector<784x128xbf16>, vector<2x128xf32> -> vector<2x128xf32>
    %c0_3 = arith.constant 0 : index
    %c0_4 = arith.constant 0 : index
    %4 = vector.load %arg3[%c0_3, %c0_4] : memref<1x128xf32, #tpu.memory_space<vmem>>, vector<1x128xf32>
    %5 = vector.broadcast %4 : vector<1x128xf32> to vector<2x128xf32>
    %6 = arith.addf %3, %5 : vector<2x128xf32>
    %cst_5 = arith.constant 0.000000e+00 : f32
    %7 = vector.broadcast %cst_5 : f32 to vector<2x128xf32>
    %8 = arith.cmpf oge, %6, %7 : vector<2x128xf32>
    %cst_6 = arith.constant 2.000000e-01 : f32
    %9 = vector.broadcast %cst_6 : f32 to vector<2x128xf32>
    %10 = arith.mulf %9, %6 : vector<2x128xf32>
    %11 = arith.select %8, %6, %10 : vector<2x128xi1>, vector<2x128xf32>
    %12 = arith.truncf %11 : vector<2x128xf32> to vector<2x128xbf16>
    %c0_7 = arith.constant 0 : index
    %c0_8 = arith.constant 0 : index
    %13 = vector.load %arg4[%c0_7, %c0_8] : memref<128x64xbf16, #tpu.memory_space<vmem>>, vector<128x64xbf16>
    %cst_9 = arith.constant dense<0.000000e+00> : vector<2x64xf32>
    %14 = tpu.matmul %12, %13, %cst_9 {dimension_numbers = #tpu.dot_dimension_numbers<[1], [0], [0], [1], [0, 0, 1, 1], [], []>} : vector<2x128xbf16>, vector<128x64xbf16>, vector<2x64xf32> -> vector<2x64xf32>
    %c0_10 = arith.constant 0 : index
    %c0_11 = arith.constant 0 : index
    %15 = vector.load %arg5[%c0_10, %c0_11] : memref<1x64xf32, #tpu.memory_space<vmem>>, vector<1x64xf32>
    %16 = vector.broadcast %15 : vector<1x64xf32> to vector<2x64xf32>
    %17 = arith.addf %14, %16 : vector<2x64xf32>
    %cst_12 = arith.constant 0.000000e+00 : f32
    %18 = vector.broadcast %cst_12 : f32 to vector<2x64xf32>
    %19 = arith.cmpf oge, %17, %18 : vector<2x64xf32>
    %cst_13 = arith.constant 2.000000e-01 : f32
    %20 = vector.broadcast %cst_13 : f32 to vector<2x64xf32>
    %21 = arith.mulf %20, %17 : vector<2x64xf32>
    %22 = arith.select %19, %17, %21 : vector<2x64xi1>, vector<2x64xf32>
    %23 = arith.truncf %22 : vector<2x64xf32> to vector<2x64xbf16>
    %c0_14 = arith.constant 0 : index
    %c0_15 = arith.constant 0 : index
    %24 = vector.load %arg6[%c0_14, %c0_15] : memref<64x32xbf16, #tpu.memory_space<vmem>>, vector<64x32xbf16>
    %cst_16 = arith.constant dense<0.000000e+00> : vector<2x32xf32>
    %25 = tpu.matmul %23, %24, %cst_16 {dimension_numbers = #tpu.dot_dimension_numbers<[1], [0], [0], [1], [0, 0, 1, 1], [], []>} : vector<2x64xbf16>, vector<64x32xbf16>, vector<2x32xf32> -> vector<2x32xf32>
    %c0_17 = arith.constant 0 : index
    %c0_18 = arith.constant 0 : index
    %26 = vector.load %arg7[%c0_17, %c0_18] : memref<1x32xf32, #tpu.memory_space<vmem>>, vector<1x32xf32>
    %27 = vector.broadcast %26 : vector<1x32xf32> to vector<2x32xf32>
    %28 = arith.addf %25, %27 : vector<2x32xf32>
    %cst_19 = arith.constant 0.000000e+00 : f32
    %29 = vector.broadcast %cst_19 : f32 to vector<2x32xf32>
    %30 = arith.cmpf oge, %28, %29 : vector<2x32xf32>
    %cst_20 = arith.constant 2.000000e-01 : f32
    %31 = vector.broadcast %cst_20 : f32 to vector<2x32xf32>
    %32 = arith.mulf %31, %28 : vector<2x32xf32>
    %33 = arith.select %30, %28, %32 : vector<2x32xi1>, vector<2x32xf32>
    %c0_21 = arith.constant 0 : index
    %c0_22 = arith.constant 0 : index
    %34 = vector.load %arg8[%c0_21, %c0_22] : memref<2x32xf32, #tpu.memory_space<vmem>>, vector<2x32xf32>
    tpu.vector_store %arg8[%c0_21, %c0_22], %33 {strides = array<i32>} : memref<2x32xf32, #tpu.memory_space<vmem>>, vector<2x32xf32>,
    return
  }
  func.func @transform_0(%arg0: i32) -> (i32, i32) {
    %c0_i32 = arith.constant 0 : i32
    %c0_i32_0 = arith.constant 0 : i32
    return %arg0, %c0_i32 : i32, i32
  }
  func.func @transform_1(%arg0: i32) -> (i32, i32) {
    %c0_i32 = arith.constant 0 : i32
    %c0_i32_0 = arith.constant 0 : i32
    %c0_i32_1 = arith.constant 0 : i32
    return %c0_i32, %c0_i32_0 : i32, i32
  }
  func.func @transform_2(%arg0: i32) -> (i32, i32) {
    %c0_i32 = arith.constant 0 : i32
    %c0_i32_0 = arith.constant 0 : i32
    %c0_i32_1 = arith.constant 0 : i32
    return %c0_i32, %c0_i32_0 : i32, i32
  }
  func.func @transform_3(%arg0: i32) -> (i32, i32) {
    %c0_i32 = arith.constant 0 : i32
    %c0_i32_0 = arith.constant 0 : i32
    %c0_i32_1 = arith.constant 0 : i32
    return %c0_i32, %c0_i32_0 : i32, i32
  }
  func.func @transform_4(%arg0: i32) -> (i32, i32) {
    %c0_i32 = arith.constant 0 : i32
    %c0_i32_0 = arith.constant 0 : i32
    %c0_i32_1 = arith.constant 0 : i32
    return %c0_i32, %c0_i32_0 : i32, i32
  }
  func.func @transform_5(%arg0: i32) -> (i32, i32) {
    %c0_i32 = arith.constant 0 : i32
    %c0_i32_0 = arith.constant 0 : i32
    %c0_i32_1 = arith.constant 0 : i32
    return %c0_i32, %c0_i32_0 : i32, i32
  }
  func.func @transform_6(%arg0: i32) -> (i32, i32) {
    %c0_i32 = arith.constant 0 : i32
    %c0_i32_0 = arith.constant 0 : i32
    %c0_i32_1 = arith.constant 0 : i32
    return %c0_i32, %c0_i32_0 : i32, i32
  }
  func.func @transform_7(%arg0: i32) -> (i32, i32) {
    %c0_i32 = arith.constant 0 : i32
    %c0_i32_0 = arith.constant 0 : i32
    return %arg0, %c0_i32 : i32, i32
  }
}

</mosaic_0001>

<llo_original>
// kernel: tpu_custom_call.1
$region0: #{tpu_custom_call.1}
  #allocation0 [shape = 'u32[]', space=smem, size = 0x4, offset = 0x4, fixed_abs, tag = 'smem constant byte address 0x4 - core index']
  #allocation1 [shape = 'u32[144,128]{1,0:T(1,128)}', space=vmem, size = 0x12000, scoped, tag = 'internal scratch']
  %s0 = inlined_call_operand.vmem [shape: f32[2,784], index: 0, kind: input, shape index: {}]
  %s1 = inlined_call_operand.hbm [shape: bf16[784,128], index: 1, kind: input, shape index: {}]
  %s2 = inlined_call_operand.vmem [shape: f32[1,128], index: 2, kind: input, shape index: {}]
  %s3 = inlined_call_operand.vmem [shape: bf16[128,64], index: 3, kind: input, shape index: {}]
  %s4 = inlined_call_operand.vmem [shape: f32[1,64], index: 4, kind: input, shape index: {}]
  %s5 = inlined_call_operand.vmem [shape: bf16[64,32], index: 5, kind: input, shape index: {}]
  %s6 = inlined_call_operand.vmem [shape: f32[1,32], index: 6, kind: input, shape index: {}]
  %s7 = inlined_call_operand.hbm [shape: f32[2,32], index: 7, kind: output, shape index: {}]
  %s8 = sld [smem:[#allocation0]]
  $region42: #{tpu_custom_call.1} parent=0
    _
  %s10 = ssub.s32 1, %s8
  %s11 = scalar_select 0, %s10, %s8
  $region1: #{tpu_custom_call.1} parent=0
    #allocation2 [shape = 'u8[200704]{0}', space=vmem, size = 0x31000, scoped, tag = 'input window, operand 1, single buffered']
    #allocation3 [shape = 's32[1]{0}', space=sflag, size = 0x4, scoped, tag = 'scoped memory for tpu_custom_call.1']
    #allocation4 [shape = 's32[1]{0}', space=sflag, size = 0x4, scoped, tag = 'scoped memory for tpu_custom_call.1']
    #allocation5 [shape = 'u8[1024]{0}', space=vmem, size = 0x400, scoped, tag = 'output window, operand 0, single buffered']
    %12 = vsyncpa [#allocation3], 0
    %13 = vsyncpa [#allocation4], 0
    // Predicated region
    $region2: #{tpu_custom_call.1} parent=1 // pred_check
      _
    $region3: #{tpu_custom_call.1} parent=1 // pred_check_branch
      %15 = sbr.rel (0) target = $region5
    $region4: #{tpu_custom_call.1} parent=1 // pred_region
      _
    $region5: #{tpu_custom_call.1} parent=1 // pred_fallthru
      _
    // Predicated region
    $region6: #{tpu_custom_call.1} parent=1 // pred_check
      _
    $region7: #{tpu_custom_call.1} parent=1 // pred_check_branch
      %17 = sbr.rel (0) target = $region9
    $region8: #{tpu_custom_call.1} parent=1 // pred_region
      %s19 = ssub.s32 6272, 6272
      %20 = vsyncadd [#allocation3], %s19
      %s21 = sshll.u32 [#allocation2], 4
      %s22 = int_to_ptr.vmem [resolvable:$true] %s21
      %27 = dma.hbm_to_vmem [thread:$0]  %s1, 6272, %s22, [#allocation3], 64, 64, 4
    $region9: #{tpu_custom_call.1} parent=1 // pred_fallthru
      _
    // Predicated region
    $region10: #{tpu_custom_call.1} parent=1 // pred_check
      _
    $region11: #{tpu_custom_call.1} parent=1 // pred_check_branch
      %29 = sbr.rel (0) target = $region13
    $region12: #{tpu_custom_call.1} parent=1 // pred_region
      _
    $region13: #{tpu_custom_call.1} parent=1 // pred_fallthru
      _
    // Predicated region
    $region14: #{tpu_custom_call.1} parent=1 // pred_check
      _
    $region15: #{tpu_custom_call.1} parent=1 // pred_check_branch
      %31 = sbr.rel (0) target = $region17
    $region16: #{tpu_custom_call.1} parent=1 // pred_region
      _
    $region17: #{tpu_custom_call.1} parent=1 // pred_fallthru
      _
    // Predicated region
    $region18: #{tpu_custom_call.1} parent=1 // pred_check
      _
    $region19: #{tpu_custom_call.1} parent=1 // pred_check_branch
      %33 = sbr.rel (0) target = $region21
    $region20: #{tpu_custom_call.1} parent=1 // pred_region
      _
    $region21: #{tpu_custom_call.1} parent=1 // pred_fallthru
      _
    // Predicated region
    $region22: #{tpu_custom_call.1} parent=1 // pred_check
      _
    $region23: #{tpu_custom_call.1} parent=1 // pred_check_branch
      %35 = sbr.rel (0) target = $region25
    $region24: #{tpu_custom_call.1} parent=1 // pred_region
      _
    $region25: #{tpu_custom_call.1} parent=1 // pred_fallthru
      _
    // Predicated region
    $region26: #{tpu_custom_call.1} parent=1 // pred_check
      _
    $region27: #{tpu_custom_call.1} parent=1 // pred_check_branch
      %37 = sbr.rel (0) target = $region29
    $region28: #{tpu_custom_call.1} parent=1 // pred_region
      _
    $region29: #{tpu_custom_call.1} parent=1 // pred_fallthru
      _
    // Predicated region
    $region30: #{tpu_custom_call.1} parent=1 // pred_check
      _
    $region31: #{tpu_custom_call.1} parent=1 // pred_check_branch
      %39 = sbr.rel (0) target = $region33
    $region32: #{tpu_custom_call.1} parent=1 // pred_region
      %40 = dma.done [#allocation3], 6272
    $region33: #{tpu_custom_call.1} parent=1 // pred_fallthru
      _
    %v42 = vld [vmem:[%s0] sm:$0xff]
    %v43 = vld [vmem:[%s0 + $0x8] sm:$0x3f]
    %v46 = vcombine.high %v42, %v42
    %v48 = vunpack.c.l.s4 1983009808
    %v49 = vunpack.c.0.s8 %v48
    %v50 = vlaneseq
    %v51 = vshrl.u32 %v50, 7
    %v52 = vsub.s32 %v49, %v51
    %v53 = vrot.slane %v42, %v52
    %v55 = vunpack.c.l.s4 1983009808
    %v56 = vunpack.c.0.s8 %v55
    %v57 = vlaneseq
    %v58 = vshrl.u32 %v57, 7
    %v59 = vsub.s32 %v56, %v58
    %v60 = vrot.slane %v46, %v59
    %v61 = vcombine.high %v53, %v53
    %v62 = vcombine.high %v60, %v60
    %v63 = vcombine.high %v43, %v43
    %v65 = vunpack.c.l.s4 1983009808
    %v66 = vunpack.c.0.s8 %v65
    %v67 = vlaneseq
    %v68 = vshrl.u32 %v67, 7
    %v69 = vsub.s32 %v66, %v68
    %v70 = vrot.slane %v43, %v69
    %v72 = vunpack.c.l.s4 1983009808
    %v73 = vunpack.c.0.s8 %v72
    %v74 = vlaneseq
    %v75 = vshrl.u32 %v74, 7
    %v76 = vsub.s32 %v73, %v75
    %v77 = vrot.slane %v63, %v76
    %v78 = vcombine.high %v70, %v70
    %v86 = vpack.c.bf16 %v53, %v53
    %v87 = vpack.c.bf16 %v61, %v61
    %v88 = vpack.c.bf16 %v60, %v60
    %v89 = vpack.c.bf16 %v62, %v62
    %v90 = vpack.c.bf16 %v70, %v70
    %v91 = vpack.c.bf16 %v78, %v78
    %v92 = vpack.c.bf16 %v77, %v77
    %v93 = vld [vmem:[#allocation2] sm:$0xf]
    %v94 = vld [vmem:[#allocation2 + $0x4] sm:$0xf]
    %v95 = vld [vmem:[#allocation2 + $0x8] sm:$0xf]
    %v96 = vld [vmem:[#allocation2 + $0xc] sm:$0xf]
    %v97 = vld [vmem:[#allocation2 + $0x10] sm:$0xf]
    %v98 = vld [vmem:[#allocation2 + $0x14] sm:$0xf]
    %v99 = vld [vmem:[#allocation2 + $0x18] sm:$0xf]
    %v100 = vld [vmem:[#allocation2 + $0x1c] sm:$0xf]
    %v101 = vld [vmem:[#allocation2 + $0x20] sm:$0xf]
    %v102 = vld [vmem:[#allocation2 + $0x24] sm:$0xf]
    %v103 = vld [vmem:[#allocation2 + $0x28] sm:$0xf]
    %v104 = vld [vmem:[#allocation2 + $0x2c] sm:$0xf]
    %v105 = vld [vmem:[#allocation2 + $0x30] sm:$0xf]
    %v106 = vld [vmem:[#allocation2 + $0x34] sm:$0xf]
    %v107 = vld [vmem:[#allocation2 + $0x38] sm:$0xf]
    %v108 = vld [vmem:[#allocation2 + $0x3c] sm:$0xf]
    %v109 = vld [vmem:[#allocation2 + $0x40] sm:$0xf]
    %v110 = vld [vmem:[#allocation2 + $0x44] sm:$0xf]
    %v111 = vld [vmem:[#allocation2 + $0x48] sm:$0xf]
    %v112 = vld [vmem:[#allocation2 + $0x4c] sm:$0xf]
    %v113 = vld [vmem:[#allocation2 + $0x50] sm:$0xf]
    %v114 = vld [vmem:[#allocation2 + $0x54] sm:$0xf]
    %v115 = vld [vmem:[#allocation2 + $0x58] sm:$0xf]
    %v116 = vld [vmem:[#allocation2 + $0x5c] sm:$0xf]
    %v117 = vld [vmem:[#allocation2 + $0x60] sm:$0xf]
    %v118 = vld [vmem:[#allocation2 + $0x64] sm:$0xf]
    %v119 = vld [vmem:[#allocation2 + $0x68] sm:$0xf]
    %v120 = vld [vmem:[#allocation2 + $0x6c] sm:$0xf]
    %v121 = vld [vmem:[#allocation2 + $0x70] sm:$0xf]
    %v122 = vld [vmem:[#allocation2 + $0x74] sm:$0xf]
    %v123 = vld [vmem:[#allocation2 + $0x78] sm:$0xf]
    %v124 = vld [vmem:[#allocation2 + $0x7c] sm:$0xf]
    %v125 = vld [vmem:[#allocation2 + $0x80] sm:$0xf]
    %v126 = vld [vmem:[#allocation2 + $0x84] sm:$0xf]
    %v127 = vld [vmem:[#allocation2 + $0x88] sm:$0xf]
    %v128 = vld [vmem:[#allocation2 + $0x8c] sm:$0xf]
    %v129 = vld [vmem:[#allocation2 + $0x90] sm:$0xf]
    %v130 = vld [vmem:[#allocation2 + $0x94] sm:$0xf]
    %v131 = vld [vmem:[#allocation2 + $0x98] sm:$0xf]
    %v132 = vld [vmem:[#allocation2 + $0x9c] sm:$0xf]
    %v133 = vld [vmem:[#allocation2 + $0xa0] sm:$0xf]
    %v134 = vld [vmem:[#allocation2 + $0xa4] sm:$0xf]
    %v135 = vld [vmem:[#allocation2 + $0xa8] sm:$0xf]
    %v136 = vld [vmem:[#allocation2 + $0xac] sm:$0xf]
    %v137 = vld [vmem:[#allocation2 + $0xb0] sm:$0xf]
    %v138 = vld [vmem:[#allocation2 + $0xb4] sm:$0xf]
    %v139 = vld [vmem:[#allocation2 + $0xb8] sm:$0xf]
    %v140 = vld [vmem:[#allocation2 + $0xbc] sm:$0xf]
    %v141 = vld [vmem:[#allocation2 + $0xc0] sm:$0xf]
    %v142 = vld [vmem:[#allocation2 + $0xc4] sm:$0xf]
    %v143 = vld [vmem:[#allocation2 + $0xc8] sm:$0xf]
    %v144 = vld [vmem:[#allocation2 + $0xcc] sm:$0xf]
    %v145 = vld [vmem:[#allocation2 + $0xd0] sm:$0xf]
    %v146 = vld [vmem:[#allocation2 + $0xd4] sm:$0xf]
    %v147 = vld [vmem:[#allocation2 + $0xd8] sm:$0xf]
    %v148 = vld [vmem:[#allocation2 + $0xdc] sm:$0xf]
    %v149 = vld [vmem:[#allocation2 + $0xe0] sm:$0xf]
    %v150 = vld [vmem:[#allocation2 + $0xe4] sm:$0xf]
    %v151 = vld [vmem:[#allocation2 + $0xe8] sm:$0xf]
    %v152 = vld [vmem:[#allocation2 + $0xec] sm:$0xf]
    %v153 = vld [vmem:[#allocation2 + $0xf0] sm:$0xf]
    %v154 = vld [vmem:[#allocation2 + $0xf4] sm:$0xf]
    %v155 = vld [vmem:[#allocation2 + $0xf8] sm:$0xf]
    %v156 = vld [vmem:[#allocation2 + $0xfc] sm:$0xf]
    %v157 = vld [vmem:[#allocation2 + $0x100] sm:$0xf]
    %v158 = vld [vmem:[#allocation2 + $0x104] sm:$0xf]
    %v159 = vld [vmem:[#allocation2 + $0x108] sm:$0xf]
    %v160 = vld [vmem:[#allocation2 + $0x10c] sm:$0xf]
    %v161 = vld [vmem:[#allocation2 + $0x110] sm:$0xf]
    %v162 = vld [vmem:[#allocation2 + $0x114] sm:$0xf]
    %v163 = vld [vmem:[#allocation2 + $0x118] sm:$0xf]
    %v164 = vld [vmem:[#allocation2 + $0x11c] sm:$0xf]
    %v165 = vld [vmem:[#allocation2 + $0x120] sm:$0xf]
    %v166 = vld [vmem:[#allocation2 + $0x124] sm:$0xf]
    %v167 = vld [vmem:[#allocation2 + $0x128] sm:$0xf]
    %v168 = vld [vmem:[#allocation2 + $0x12c] sm:$0xf]
    %v169 = vld [vmem:[#allocation2 + $0x130] sm:$0xf]
    %v170 = vld [vmem:[#allocation2 + $0x134] sm:$0xf]
    %v171 = vld [vmem:[#allocation2 + $0x138] sm:$0xf]
    %v172 = vld [vmem:[#allocation2 + $0x13c] sm:$0xf]
    %v173 = vld [vmem:[#allocation2 + $0x140] sm:$0xf]
    %v174 = vld [vmem:[#allocation2 + $0x144] sm:$0xf]
    %v175 = vld [vmem:[#allocation2 + $0x148] sm:$0xf]
    %v176 = vld [vmem:[#allocation2 + $0x14c] sm:$0xf]
    %v177 = vld [vmem:[#allocation2 + $0x150] sm:$0xf]
    %v178 = vld [vmem:[#allocation2 + $0x154] sm:$0xf]
    %v179 = vld [vmem:[#allocation2 + $0x158] sm:$0xf]
    %v180 = vld [vmem:[#allocation2 + $0x15c] sm:$0xf]
    %v181 = vld [vmem:[#allocation2 + $0x160] sm:$0xf]
    %v182 = vld [vmem:[#allocation2 + $0x164] sm:$0xf]
    %v183 = vld [vmem:[#allocation2 + $0x168] sm:$0xf]
    %v184 = vld [vmem:[#allocation2 + $0x16c] sm:$0xf]
    %v185 = vld [vmem:[#allocation2 + $0x170] sm:$0xf]
    %v186 = vld [vmem:[#allocation2 + $0x174] sm:$0xf]
    %v187 = vld [vmem:[#allocation2 + $0x178] sm:$0xf]
    %v188 = vld [vmem:[#allocation2 + $0x17c] sm:$0xf]
    %v189 = vld [vmem:[#allocation2 + $0x180] sm:$0xf]
    %v190 = vld [vmem:[#allocation2 + $0x184] sm:$0xf]
    %v191 = vld [vmem:[%s2] sm:$0x1]
    %v193 = vlaneseq
    %v194 = vshrl.u32 %v193, 7
    %v195 = vsub.s32 0, %v194
    %v196 = vrot.slane %v191, %v195
    %v296 = vunpack.c.l.b16 %v93
    %v297 = vunpack.c.l.b16 %v94
    %v298 = vunpack.c.l.b16 %v95
    %v299 = vunpack.c.l.b16 %v96
    %v300 = vunpack.c.l.b16 %v97
    %v301 = vunpack.c.l.b16 %v98
    %v302 = vunpack.c.l.b16 %v99
    %v303 = vunpack.c.l.b16 %v100
    %v304 = vunpack.c.l.b16 %v101
    %v305 = vunpack.c.l.b16 %v102
    %v306 = vunpack.c.l.b16 %v103
    %v307 = vunpack.c.l.b16 %v104
    %v308 = vunpack.c.l.b16 %v105
    %v309 = vunpack.c.l.b16 %v106
    %v310 = vunpack.c.l.b16 %v107
    %v311 = vunpack.c.l.b16 %v108
    %v312 = vunpack.c.l.b16 %v109
    %v313 = vunpack.c.l.b16 %v110
    %v314 = vunpack.c.l.b16 %v111
    %v315 = vunpack.c.l.b16 %v112
    %v316 = vunpack.c.l.b16 %v113
    %v317 = vunpack.c.l.b16 %v114
    %v318 = vunpack.c.l.b16 %v115
    %v319 = vunpack.c.l.b16 %v116
    %v320 = vunpack.c.l.b16 %v117
    %v321 = vunpack.c.l.b16 %v118
    %v322 = vunpack.c.l.b16 %v119
    %v323 = vunpack.c.l.b16 %v120
    %v324 = vunpack.c.l.b16 %v121
    %v325 = vunpack.c.l.b16 %v122
    %v326 = vunpack.c.l.b16 %v123
    %v327 = vunpack.c.l.b16 %v124
    %v328 = vunpack.c.l.b16 %v125
    %v329 = vunpack.c.l.b16 %v126
    %v330 = vunpack.c.l.b16 %v127
    %v331 = vunpack.c.l.b16 %v128
    %v332 = vunpack.c.l.b16 %v129
    %v333 = vunpack.c.l.b16 %v130
    %v334 = vunpack.c.l.b16 %v131
    %v335 = vunpack.c.l.b16 %v132
    %v336 = vunpack.c.l.b16 %v133
    %v337 = vunpack.c.l.b16 %v134
    %v338 = vunpack.c.l.b16 %v135
    %v339 = vunpack.c.l.b16 %v136
    %v340 = vunpack.c.l.b16 %v137
    %v341 = vunpack.c.l.b16 %v138
    %v342 = vunpack.c.l.b16 %v139
    %v343 = vunpack.c.l.b16 %v140
    %v344 = vunpack.c.l.b16 %v141
    %v345 = vunpack.c.l.b16 %v142
    %v346 = vunpack.c.l.b16 %v143
    %v347 = vunpack.c.l.b16 %v144
    %v348 = vunpack.c.l.b16 %v145
    %v349 = vunpack.c.l.b16 %v146
    %v350 = vunpack.c.l.b16 %v147
    %v351 = vunpack.c.l.b16 %v148
    %v352 = vunpack.c.l.b16 %v149
    %v353 = vunpack.c.l.b16 %v150
    %v354 = vunpack.c.l.b16 %v151
    %v355 = vunpack.c.l.b16 %v152
    %v356 = vunpack.c.l.b16 %v153
    %v357 = vunpack.c.l.b16 %v154
    %v358 = vunpack.c.l.b16 %v155
    %v359 = vunpack.c.l.b16 %v156
    %v360 = vunpack.c.l.b16 %v157
    %v361 = vunpack.c.l.b16 %v158
    %v362 = vunpack.c.l.b16 %v159
    %v363 = vunpack.c.l.b16 %v160
    %v364 = vunpack.c.l.b16 %v161
    %v365 = vunpack.c.l.b16 %v162
    %v366 = vunpack.c.l.b16 %v163
    %v367 = vunpack.c.l.b16 %v164
    %v368 = vunpack.c.l.b16 %v165
    %v369 = vunpack.c.l.b16 %v166
    %v370 = vunpack.c.l.b16 %v167
    %v371 = vunpack.c.l.b16 %v168
    %v372 = vunpack.c.l.b16 %v169
    %v373 = vunpack.c.l.b16 %v170
    %v374 = vunpack.c.l.b16 %v171
    %v375 = vunpack.c.l.b16 %v172
    %v376 = vunpack.c.l.b16 %v173
    %v377 = vunpack.c.l.b16 %v174
    %v378 = vunpack.c.l.b16 %v175
    %v379 = vunpack.c.l.b16 %v176
    %v380 = vunpack.c.l.b16 %v177
    %v381 = vunpack.c.l.b16 %v178
    %v382 = vunpack.c.l.b16 %v179
    %v383 = vunpack.c.l.b16 %v180
    %v384 = vunpack.c.l.b16 %v181
    %v385 = vunpack.c.l.b16 %v182
    %v386 = vunpack.c.l.b16 %v183
    %v387 = vunpack.c.l.b16 %v184
    %v388 = vunpack.c.l.b16 %v185
    %v389 = vunpack.c.l.b16 %v186
    %v390 = vunpack.c.l.b16 %v187
    %v391 = vunpack.c.l.b16 %v188
    %v392 = vunpack.c.l.b16 %v189
    %v393 = vunpack.c.l.b16 %v190
    %v394 = vpack.c.b16 %v297, %v296
    %v395 = vpack.c.b16 %v299, %v298
    %v396 = vpack.c.b16 %v301, %v300
    %v397 = vpack.c.b16 %v303, %v302
    %v398 = vpack.c.b16 %v305, %v304
    %v399 = vpack.c.b16 %v307, %v306
    %v400 = vpack.c.b16 %v309, %v308
    %v401 = vpack.c.b16 %v311, %v310
    %v402 = vpack.c.b16 %v313, %v312
    %v403 = vpack.c.b16 %v315, %v314
    %v404 = vpack.c.b16 %v317, %v316
    %v405 = vpack.c.b16 %v319, %v318
    %v406 = vpack.c.b16 %v321, %v320
    %v407 = vpack.c.b16 %v323, %v322
    %v408 = vpack.c.b16 %v325, %v324
    %v409 = vpack.c.b16 %v327, %v326
    %v410 = vpack.c.b16 %v329, %v328
    %v411 = vpack.c.b16 %v331, %v330
    %v412 = vpack.c.b16 %v333, %v332
    %v413 = vpack.c.b16 %v335, %v334
    %v414 = vpack.c.b16 %v337, %v336
    %v415 = vpack.c.b16 %v339, %v338
    %v416 = vpack.c.b16 %v341, %v340
    %v417 = vpack.c.b16 %v343, %v342
    %v418 = vpack.c.b16 %v345, %v344
    %v419 = vpack.c.b16 %v347, %v346
    %v420 = vpack.c.b16 %v349, %v348
    %v421 = vpack.c.b16 %v351, %v350
    %v422 = vpack.c.b16 %v353, %v352
    %v423 = vpack.c.b16 %v355, %v354
    %v424 = vpack.c.b16 %v357, %v356
    %v425 = vpack.c.b16 %v359, %v358
    %v426 = vpack.c.b16 %v361, %v360
    %v427 = vpack.c.b16 %v363, %v362
    %v428 = vpack.c.b16 %v365, %v364
    %v429 = vpack.c.b16 %v367, %v366
    %v430 = vpack.c.b16 %v369, %v368
    %v431 = vpack.c.b16 %v371, %v370
    %v432 = vpack.c.b16 %v373, %v372
    %v433 = vpack.c.b16 %v375, %v374
    %v434 = vpack.c.b16 %v377, %v376
    %v435 = vpack.c.b16 %v379, %v378
    %v436 = vpack.c.b16 %v381, %v380
    %v437 = vpack.c.b16 %v383, %v382
    %v438 = vpack.c.b16 %v385, %v384
    %v439 = vpack.c.b16 %v387, %v386
    %v440 = vpack.c.b16 %v389, %v388
    %v441 = vpack.c.b16 %v391, %v390
    %v442 = vpack.c.b16 %v393, %v392
    %vm492 = vcmask 130048
    %v494 = vsel %vm492, %v92, 0
    %496 = vmatprep.subr.bf16.mxu0 0
    %497 = vmatpush1.bf16.msra.mxu0 %v394
    %498 = vmatprep.subr.bf16.mxu0 0
    %499 = vmatpush1.bf16.msra.mxu0 %v395
    %500 = vmatprep.subr.bf16.mxu0 0
    %501 = vmatpush1.bf16.msra.mxu0 %v396
    %502 = vmatprep.subr.bf16.mxu0 0
    %503 = vmatpush1.bf16.msra.mxu0 %v397
    %504 = vmatprep.subr.bf16.mxu0 0
    %505 = vmatpush1.bf16.msra.mxu0 %v398
    %506 = vmatprep.subr.bf16.mxu0 0
    %507 = vmatpush1.bf16.msra.mxu0 %v399
    %508 = vmatprep.subr.bf16.mxu0 0
    %509 = vmatpush1.bf16.msra.mxu0 %v400
    %510 = vmatprep.subr.bf16.mxu0 0
    %511 = vmatpush1.bf16.msra.mxu0 %v401
    %512 = vmatprep.subr.bf16.mxu0 0
    %513 = vmatpush1.bf16.msra.mxu0 %v402
    %514 = vmatprep.subr.bf16.mxu0 0
    %515 = vmatpush1.bf16.msra.mxu0 %v403
    %516 = vmatprep.subr.bf16.mxu0 0
    %517 = vmatpush1.bf16.msra.mxu0 %v404
    %518 = vmatprep.subr.bf16.mxu0 0
    %519 = vmatpush1.bf16.msra.mxu0 %v405
    %520 = vmatprep.subr.bf16.mxu0 0
    %521 = vmatpush1.bf16.msra.mxu0 %v406
    %522 = vmatprep.subr.bf16.mxu0 0
    %523 = vmatpush1.bf16.msra.mxu0 %v407
    %524 = vmatprep.subr.bf16.mxu0 0
    %525 = vmatpush1.bf16.msra.mxu0 %v408
    %526 = vmatprep.subr.bf16.mxu0 0
    %527 = vmatpush1.bf16.msra.mxu0 %v409
    %528 = vmatprep.mubr.bf16.mxu0 %v87
    %529 = vmatmul.mubr.bf16.gmra.mrb[0].mxu0 %v86
    %v530 = vpop.f32.mrb[0].mxu0
    %v531 = vadd.f32 %v196, %v530
    %v532 = vpop.f32.mrb[0].mxu0
    %v533 = vpop.f32.mrb[0].mxu0
    %v534 = vpop.f32.mrb[0].mxu0
    %535 = vdwg.mxu0
    %536 = vmatprep.subr.bf16.mxu0 0
    %537 = vmatpush1.bf16.msra.mxu0 %v410
    %538 = vmatprep.subr.bf16.mxu0 0
    %539 = vmatpush1.bf16.msra.mxu0 %v411
    %540 = vmatprep.subr.bf16.mxu0 0
    %541 = vmatpush1.bf16.msra.mxu0 %v412
    %542 = vmatprep.subr.bf16.mxu0 0
    %543 = vmatpush1.bf16.msra.mxu0 %v413
    %544 = vmatprep.subr.bf16.mxu0 0
    %545 = vmatpush1.bf16.msra.mxu0 %v414
    %546 = vmatprep.subr.bf16.mxu0 0
    %547 = vmatpush1.bf16.msra.mxu0 %v415
    %548 = vmatprep.subr.bf16.mxu0 0
    %549 = vmatpush1.bf16.msra.mxu0 %v416
    %550 = vmatprep.subr.bf16.mxu0 0
    %551 = vmatpush1.bf16.msra.mxu0 %v417
    %552 = vmatprep.subr.bf16.mxu0 0
    %553 = vmatpush1.bf16.msra.mxu0 %v418
    %554 = vmatprep.subr.bf16.mxu0 0
    %555 = vmatpush1.bf16.msra.mxu0 %v419
    %556 = vmatprep.subr.bf16.mxu0 0
    %557 = vmatpush1.bf16.msra.mxu0 %v420
    %558 = vmatprep.subr.bf16.mxu0 0
    %559 = vmatpush1.bf16.msra.mxu0 %v421
    %560 = vmatprep.subr.bf16.mxu0 0
    %561 = vmatpush1.bf16.msra.mxu0 %v422
    %562 = vmatprep.subr.bf16.mxu0 0
    %563 = vmatpush1.bf16.msra.mxu0 %v423
    %564 = vmatprep.subr.bf16.mxu0 0
    %565 = vmatpush1.bf16.msra.mxu0 %v424
    %566 = vmatprep.subr.bf16.mxu0 0
    %567 = vmatpush1.bf16.msra.mxu0 %v425
    %568 = vmatprep.mubr.bf16.mxu0 %v89
    %569 = vmatmul.mubr.bf16.gmra.mrb[0].mxu0 %v88
    %v570 = vpop.f32.mrb[0].mxu0
    %v571 = vadd.f32 %v531, %v570
    %v572 = vpop.f32.mrb[0].mxu0
    %v573 = vpop.f32.mrb[0].mxu0
    %v574 = vpop.f32.mrb[0].mxu0
    %575 = vdwg.mxu0
    %576 = vmatprep.subr.bf16.mxu0 0
    %577 = vmatpush1.bf16.msra.mxu0 %v426
    %578 = vmatprep.subr.bf16.mxu0 0
    %579 = vmatpush1.bf16.msra.mxu0 %v427
    %580 = vmatprep.subr.bf16.mxu0 0
    %581 = vmatpush1.bf16.msra.mxu0 %v428
    %582 = vmatprep.subr.bf16.mxu0 0
    %583 = vmatpush1.bf16.msra.mxu0 %v429
    %584 = vmatprep.subr.bf16.mxu0 0
    %585 = vmatpush1.bf16.msra.mxu0 %v430
    %586 = vmatprep.subr.bf16.mxu0 0
    %587 = vmatpush1.bf16.msra.mxu0 %v431
    %588 = vmatprep.subr.bf16.mxu0 0
    %589 = vmatpush1.bf16.msra.mxu0 %v432
    %590 = vmatprep.subr.bf16.mxu0 0
    %591 = vmatpush1.bf16.msra.mxu0 %v433
    %592 = vmatprep.subr.bf16.mxu0 0
    %593 = vmatpush1.bf16.msra.mxu0 %v434
    %594 = vmatprep.subr.bf16.mxu0 0
    %595 = vmatpush1.bf16.msra.mxu0 %v435
    %596 = vmatprep.subr.bf16.mxu0 0
    %597 = vmatpush1.bf16.msra.mxu0 %v436
    %598 = vmatprep.subr.bf16.mxu0 0
    %599 = vmatpush1.bf16.msra.mxu0 %v437
    %600 = vmatprep.subr.bf16.mxu0 0
    %601 = vmatpush1.bf16.msra.mxu0 %v438
    %602 = vmatprep.subr.bf16.mxu0 0
    %603 = vmatpush1.bf16.msra.mxu0 %v439
    %604 = vmatprep.subr.bf16.mxu0 0
    %605 = vmatpush1.bf16.msra.mxu0 %v440
    %606 = vmatprep.subr.bf16.mxu0 0
    %607 = vmatpush1.bf16.msra.mxu0 %v441
    %608 = vmatprep.mubr.bf16.mxu0 %v91
    %609 = vmatmul.mubr.bf16.gmra.mrb[0].mxu0 %v90
    %v610 = vpop.f32.mrb[0].mxu0
    %v611 = vadd.f32 %v571, %v610
    %v612 = vpop.f32.mrb[0].mxu0
    %v613 = vpop.f32.mrb[0].mxu0
    %v614 = vpop.f32.mrb[0].mxu0
    %615 = vdwg.mxu0
    %616 = vmatprep.subr.bf16.mxu0 0
    %617 = vmatpush1.bf16.msra.mxu0 %v442
    %618 = vmatprep.subr.bf16.mxu0 0
    %619 = vmatpush1.bf16.msra.mxu0 0
    %620 = vmatprep.subr.bf16.mxu0 0
    %621 = vmatpush1.bf16.msra.mxu0 0
    %622 = vmatprep.subr.bf16.mxu0 0
    %623 = vmatpush1.bf16.msra.mxu0 0
    %624 = vmatprep.subr.bf16.mxu0 0
    %625 = vmatpush1.bf16.msra.mxu0 0
    %626 = vmatprep.subr.bf16.mxu0 0
    %627 = vmatpush1.bf16.msra.mxu0 0
    %628 = vmatprep.subr.bf16.mxu0 0
    %629 = vmatpush1.bf16.msra.mxu0 0
    %630 = vmatprep.subr.bf16.mxu0 0
    %631 = vmatpush1.bf16.msra.mxu0 0
    %632 = vmatprep.subr.bf16.mxu0 0
    %633 = vmatpush1.bf16.msra.mxu0 0
    %634 = vmatprep.subr.bf16.mxu0 0
    %635 = vmatpush1.bf16.msra.mxu0 0
    %636 = vmatprep.subr.bf16.mxu0 0
    %637 = vmatpush1.bf16.msra.mxu0 0
    %638 = vmatprep.subr.bf16.mxu0 0
    %639 = vmatpush1.bf16.msra.mxu0 0
    %640 = vmatprep.subr.bf16.mxu0 0
    %641 = vmatpush1.bf16.msra.mxu0 0
    %642 = vmatprep.subr.bf16.mxu0 0
    %643 = vmatpush1.bf16.msra.mxu0 0
    %644 = vmatprep.subr.bf16.mxu0 0
    %645 = vmatpush1.bf16.msra.mxu0 0
    %646 = vmatprep.subr.bf16.mxu0 0
    %647 = vmatpush1.bf16.msra.mxu0 0
    %648 = vmatprep.mubr.bf16.mxu0 0
    %649 = vmatmul.mubr.bf16.gmra.mrb[0].mxu0 %v494
    %v650 = vpop.f32.mrb[0].mxu0
    %v651 = vadd.f32 %v611, %v650
    %v652 = vpop.f32.mrb[0].mxu0
    %v653 = vpop.f32.mrb[0].mxu0
    %v654 = vpop.f32.mrb[0].mxu0
    %655 = vdwg.mxu0
    %vm656 = vcmp.ge.f32.partialorder %v651, 0.0
    %v657 = vmul.f32 %v651, 0.2
    %v658 = vsel %vm656, %v651, %v657
    %v659 = vpack.c.bf16 %v658, %v658
    %v660 = vld [vmem:[%s3] sm:$0xf]
    %v661 = vld [vmem:[%s3 + $0x4] sm:$0xf]
    %v662 = vld [vmem:[%s3 + $0x8] sm:$0xf]
    %v663 = vld [vmem:[%s3 + $0xc] sm:$0xf]
    %v664 = vld [vmem:[%s3 + $0x10] sm:$0xf]
    %v665 = vld [vmem:[%s3 + $0x14] sm:$0xf]
    %v666 = vld [vmem:[%s3 + $0x18] sm:$0xf]
    %v667 = vld [vmem:[%s3 + $0x1c] sm:$0xf]
    %v668 = vld [vmem:[%s3 + $0x20] sm:$0xf]
    %v669 = vld [vmem:[%s3 + $0x24] sm:$0xf]
    %v670 = vld [vmem:[%s3 + $0x28] sm:$0xf]
    %v671 = vld [vmem:[%s3 + $0x2c] sm:$0xf]
    %v672 = vld [vmem:[%s3 + $0x30] sm:$0xf]
    %v673 = vld [vmem:[%s3 + $0x34] sm:$0xf]
    %v674 = vld [vmem:[%s3 + $0x38] sm:$0xf]
    %v675 = vld [vmem:[%s3 + $0x3c] sm:$0xf]
    %v676 = vld [vmem:[%s4] sm:$0x1]
    %v678 = vlaneseq
    %v679 = vshrl.u32 %v678, 7
    %v680 = vsub.s32 0, %v679
    %v681 = vrot.slane %v676, %v680
    %v699 = vunpack.c.l.b16 %v660
    %v700 = vunpack.c.l.b16 %v661
    %v701 = vunpack.c.l.b16 %v662
    %v702 = vunpack.c.l.b16 %v663
    %v703 = vunpack.c.l.b16 %v664
    %v704 = vunpack.c.l.b16 %v665
    %v705 = vunpack.c.l.b16 %v666
    %v706 = vunpack.c.l.b16 %v667
    %v707 = vunpack.c.l.b16 %v668
    %v708 = vunpack.c.l.b16 %v669
    %v709 = vunpack.c.l.b16 %v670
    %v710 = vunpack.c.l.b16 %v671
    %v711 = vunpack.c.l.b16 %v672
    %v712 = vunpack.c.l.b16 %v673
    %v713 = vunpack.c.l.b16 %v674
    %v714 = vunpack.c.l.b16 %v675
    %v715 = vpack.c.b16 %v700, %v699
    %v716 = vpack.c.b16 %v702, %v701
    %v717 = vpack.c.b16 %v704, %v703
    %v718 = vpack.c.b16 %v706, %v705
    %v719 = vpack.c.b16 %v708, %v707
    %v720 = vpack.c.b16 %v710, %v709
    %v721 = vpack.c.b16 %v712, %v711
    %v722 = vpack.c.b16 %v714, %v713
    %731 = vmatprep.subr.bf16.mxu0 0
    %732 = vmatpush1.bf16.msra.mxu0 %v715
    %733 = vmatprep.subr.bf16.mxu0 0
    %734 = vmatpush1.bf16.msra.mxu0 %v716
    %735 = vmatprep.subr.bf16.mxu0 0
    %736 = vmatpush1.bf16.msra.mxu0 %v717
    %737 = vmatprep.subr.bf16.mxu0 0
    %738 = vmatpush1.bf16.msra.mxu0 %v718
    %739 = vmatprep.subr.bf16.mxu0 0
    %740 = vmatpush1.bf16.msra.mxu0 %v719
    %741 = vmatprep.subr.bf16.mxu0 0
    %742 = vmatpush1.bf16.msra.mxu0 %v720
    %743 = vmatprep.subr.bf16.mxu0 0
    %744 = vmatpush1.bf16.msra.mxu0 %v721
    %745 = vmatprep.subr.bf16.mxu0 0
    %746 = vmatpush1.bf16.msra.mxu0 %v722
    %747 = vmatprep.subr.bf16.mxu0 0
    %748 = vmatpush1.bf16.msra.mxu0 0
    %749 = vmatprep.subr.bf16.mxu0 0
    %750 = vmatpush1.bf16.msra.mxu0 0
    %751 = vmatprep.subr.bf16.mxu0 0
    %752 = vmatpush1.bf16.msra.mxu0 0
    %753 = vmatprep.subr.bf16.mxu0 0
    %754 = vmatpush1.bf16.msra.mxu0 0
    %755 = vmatprep.subr.bf16.mxu0 0
    %756 = vmatpush1.bf16.msra.mxu0 0
    %757 = vmatprep.subr.bf16.mxu0 0
    %758 = vmatpush1.bf16.msra.mxu0 0
    %759 = vmatprep.subr.bf16.mxu0 0
    %760 = vmatpush1.bf16.msra.mxu0 0
    %761 = vmatprep.subr.bf16.mxu0 0
    %762 = vmatpush1.bf16.msra.mxu0 0
    %763 = vmatprep.mubr.bf16.mxu0 0
    %764 = vmatmul.mubr.bf16.gmra.mrb[0].mxu0 %v659
    %v765 = vpop.f32.mrb[0].mxu0
    %v766 = vadd.f32 %v681, %v765
    %v767 = vpop.f32.mrb[0].mxu0
    %v768 = vpop.f32.mrb[0].mxu0
    %v769 = vpop.f32.mrb[0].mxu0
    %770 = vdwg.mxu0
    %vm771 = vcmp.ge.f32.partialorder %v766, 0.0
    %v772 = vmul.f32 %v766, 0.2
    %v773 = vsel %vm771, %v766, %v772
    %v774 = vpack.c.bf16 %v773, %v773
    %v775 = vld [vmem:[%s5] sm:$0xf]
    %v776 = vld [vmem:[%s5 + $0x4] sm:$0xf]
    %v777 = vld [vmem:[%s5 + $0x8] sm:$0xf]
    %v778 = vld [vmem:[%s5 + $0xc] sm:$0xf]
    %v779 = vld [vmem:[%s5 + $0x10] sm:$0xf]
    %v780 = vld [vmem:[%s5 + $0x14] sm:$0xf]
    %v781 = vld [vmem:[%s5 + $0x18] sm:$0xf]
    %v782 = vld [vmem:[%s5 + $0x1c] sm:$0xf]
    %v783 = vld [vmem:[%s6] sm:$0x1]
    %v785 = vlaneseq
    %v786 = vshrl.u32 %v785, 7
    %v787 = vsub.s32 0, %v786
    %v788 = vrot.slane %v783, %v787
    %v798 = vunpack.c.l.b16 %v775
    %v799 = vunpack.c.l.b16 %v776
    %v800 = vunpack.c.l.b16 %v777
    %v801 = vunpack.c.l.b16 %v778
    %v802 = vunpack.c.l.b16 %v779
    %v803 = vunpack.c.l.b16 %v780
    %v804 = vunpack.c.l.b16 %v781
    %v805 = vunpack.c.l.b16 %v782
    %v806 = vpack.c.b16 %v799, %v798
    %v807 = vpack.c.b16 %v801, %v800
    %v808 = vpack.c.b16 %v803, %v802
    %v809 = vpack.c.b16 %v805, %v804
    %vm814 = vcmask 523264
    %v816 = vsel %vm814, %v774, 0
    %818 = vmatprep.subr.bf16.mxu0 0
    %819 = vmatpush1.bf16.msra.mxu0 %v806
    %820 = vmatprep.subr.bf16.mxu0 0
    %821 = vmatpush1.bf16.msra.mxu0 %v807
    %822 = vmatprep.subr.bf16.mxu0 0
    %823 = vmatpush1.bf16.msra.mxu0 %v808
    %824 = vmatprep.subr.bf16.mxu0 0
    %825 = vmatpush1.bf16.msra.mxu0 %v809
    %826 = vmatprep.subr.bf16.mxu0 0
    %827 = vmatpush1.bf16.msra.mxu0 0
    %828 = vmatprep.subr.bf16.mxu0 0
    %829 = vmatpush1.bf16.msra.mxu0 0
    %830 = vmatprep.subr.bf16.mxu0 0
    %831 = vmatpush1.bf16.msra.mxu0 0
    %832 = vmatprep.subr.bf16.mxu0 0
    %833 = vmatpush1.bf16.msra.mxu0 0
    %834 = vmatprep.subr.bf16.mxu0 0
    %835 = vmatpush1.bf16.msra.mxu0 0
    %836 = vmatprep.subr.bf16.mxu0 0
    %837 = vmatpush1.bf16.msra.mxu0 0
    %838 = vmatprep.subr.bf16.mxu0 0
    %839 = vmatpush1.bf16.msra.mxu0 0
    %840 = vmatprep.subr.bf16.mxu0 0
    %841 = vmatpush1.bf16.msra.mxu0 0
    %842 = vmatprep.subr.bf16.mxu0 0
    %843 = vmatpush1.bf16.msra.mxu0 0
    %844 = vmatprep.subr.bf16.mxu0 0
    %845 = vmatpush1.bf16.msra.mxu0 0
    %846 = vmatprep.subr.bf16.mxu0 0
    %847 = vmatpush1.bf16.msra.mxu0 0
    %848 = vmatprep.subr.bf16.mxu0 0
    %849 = vmatpush1.bf16.msra.mxu0 0
    %850 = vmatprep.mubr.bf16.mxu0 0
    %851 = vmatmul.mubr.bf16.gmra.mrb[0].mxu0 %v816
    %v852 = vpop.f32.mrb[0].mxu0
    %v853 = vadd.f32 %v788, %v852
    %v854 = vpop.f32.mrb[0].mxu0
    %v855 = vpop.f32.mrb[0].mxu0
    %v856 = vpop.f32.mrb[0].mxu0
    %857 = vdwg.mxu0
    %vm858 = vcmp.ge.f32.partialorder %v853, 0.0
    %v859 = vmul.f32 %v853, 0.2
    %v860 = vsel %vm858, %v853, %v859
    %vm861 = vcmask 254976
    %862 = vst.msk [vmem:[#allocation5] sm:$0x3] %vm861, %v860
    // Predicated region
    $region34: #{tpu_custom_call.1} parent=1 // pred_check
      _
    $region35: #{tpu_custom_call.1} parent=1 // pred_check_branch
      %864 = sbr.rel (0) target = $region37
    $region36: #{tpu_custom_call.1} parent=1 // pred_region
      %s866 = ssub.s32 32, 32
      %867 = vsyncadd [#allocation4], %s866
      %s869 = sshll.u32 [#allocation5], 4
      %s870 = int_to_ptr.vmem [resolvable:$true] %s869
      %872 = dma.vmem_to_hbm [thread:$0]  %s870, 32, %s7, [#allocation4]
    $region37: #{tpu_custom_call.1} parent=1 // pred_fallthru
      _
    // Predicated region
    $region38: #{tpu_custom_call.1} parent=1 // pred_check
      _
    $region39: #{tpu_custom_call.1} parent=1 // pred_check_branch
      %874 = sbr.rel (0) target = $region41
    $region40: #{tpu_custom_call.1} parent=1 // pred_region
      %875 = dma.done [#allocation4], 32
    $region41: #{tpu_custom_call.1} parent=1 // pred_fallthru
      _
    %876 = vsyncpa [#allocation3], 1
    %877 = vsyncpa [#allocation4], 1

</llo_original>
